<compile_context>
chip_gen: v6e
topology: v6e:2x2x1
jax: 0.10.0
libtpu: 0.0.40
codegen_flags: <defaults>
</compile_context>

<pallas_src>
import math

import jax
import jax.numpy as jnp
from jax import lax
from jax.experimental import pallas as pl
from jax.experimental.pallas import tpu as pltpu


def _round_up(x, m):
    return ((x + m - 1) // m) * m


def _linear_bias_kernel(x_ref, w_ref, b_ref, o_ref):
    """One (tm, tn) output tile; K is the innermost ("arbitrary") grid axis.

    x_ref: (tm, tk)  activation tile
    w_ref: (tk, tn)  weight tile, already in (K, N) layout (no transpose needed)
    b_ref: (1,  tn)  bias tile
    o_ref: (tm, tn)  f32 output tile, resident across K -> used as accumulator
    """
    k = pl.program_id(2)

    @pl.when(k == 0)
    def _():
        # Initialize the resident output block with the (broadcast) bias.
        o_ref[...] = jnp.broadcast_to(b_ref[...], o_ref.shape)

    o_ref[...] += jnp.dot(
        x_ref[...], w_ref[...], preferred_element_type=jnp.float32
    )


def prepare_linear_params(weight, bias, *, tn_max=512, tk_max=1024):
    """One-time prep: transpose to (K, N), pad to tile multiples, keep originals.

    weight: (N, K) float  -- PyTorch (out_features, in_features) layout
    bias:   (N,)   float
    """
    N, K = weight.shape
    # tn multiple of 256 to fill the 256-wide MXU on v6e/v7x; tk multiple of 128.
    tn = min(tn_max, _round_up(N, 256))
    tk = min(tk_max, _round_up(K, 128))
    Np = _round_up(N, tn)
    Kp = _round_up(K, tk)

    w_kn = jnp.asarray(weight, jnp.float32).T  # (K, N)
    if (Kp, Np) != (K, N):
        w_kn = jnp.pad(w_kn, ((0, Kp - K), (0, Np - N)))
    b2d = jnp.asarray(bias, jnp.float32).reshape(1, N)
    if Np != N:
        b2d = jnp.pad(b2d, ((0, 0), (0, Np - N)))

    return {
        "w_kn": w_kn,          # (Kp, Np) padded, transposed weight (hot path)
        "b2d": b2d,            # (1, Np)  padded bias
        "weight": jnp.asarray(weight, jnp.float32),  # original, for XLA fast path
        "bias": jnp.asarray(bias, jnp.float32),
        "N": N, "K": K, "tn": tn, "tk": tk,
    }


def linear_classifier(x, params, *, tm_max=512, force_pallas=False,
                      vmem_limit_bytes=32 * 1024 * 1024):
    """y = x @ weight.T + bias  (PyTorch nn.Linear semantics), via Pallas GEMM."""
    orig_dtype = x.dtype
    K, N = params["K"], params["N"]
    assert x.shape[-1] == K, "in_dim mismatch"
    lead = x.shape[:-1]
    x2 = x.reshape(-1, K)
    M = x2.shape[0]

    tn, tk = params["tn"], params["tk"]
    w_kn, b2d = params["w_kn"], params["b2d"]
    Kp, Np = w_kn.shape

    # tm: (8-aligned) and large enough that modest batches fit in ONE M tile,
    # so the weight is streamed from HBM only once.
    tm = min(tm_max, _round_up(M, 8))
    Mp = _round_up(M, tm)

    # N leading (megacore-sharded on v7x so each core streams half the weight),
    # then M, then K innermost (reduction).
    grid = (Np // tn, Mp // tm, Kp // tk)

    if not force_pallas and grid == (1, 1, 1):
        # Tiny problem: pallas_call launch + pad/slice copies dominate; let XLA
        # fuse the whole thing.
        out = (
            jnp.dot(x2.astype(jnp.float32), params["weight"].T)
            + params["bias"]
        )
        return out.astype(orig_dtype).reshape(*lead, N)

    xf = x2.astype(jnp.float32)
    if (Mp, Kp) != (M, K):
        xf = jnp.pad(xf, ((0, Mp - M), (0, Kp - K)))

    out = pl.pallas_call(
        _linear_bias_kernel,
        out_shape=jax.ShapeDtypeStruct((Mp, Np), jnp.float32),
        grid_spec=pltpu.PrefetchScalarGridSpec(
            num_scalar_prefetch=0,
            grid=grid,
            in_specs=[
                pl.BlockSpec((tm, tk), lambda j, i, k: (i, k)),  # x
                pl.BlockSpec((tk, tn), lambda j, i, k: (k, j)),  # weight (K, N)
                pl.BlockSpec((1, tn), lambda j, i, k: (0, j)),   # bias
            ],
            out_specs=pl.BlockSpec((tm, tn), lambda j, i, k: (i, j)),
        ),
        compiler_params=pltpu.CompilerParams(
            dimension_semantics=("parallel", "parallel", "arbitrary"),
            vmem_limit_bytes=vmem_limit_bytes,
        ),
    )(xf, w_kn, b2d)

    if (Mp, Np) != (M, N):
        out = out[:M, :N]
    return out.astype(orig_dtype).reshape(*lead, N)


def init_linear_params(key, in_dim, n_classes, dtype=jnp.float32):
    """Deterministic init matching nn.Linear's default (kaiming-uniform bounds)."""
    k_w, k_b = jax.random.split(key)
    bound = 1.0 / math.sqrt(in_dim)
    weight = jax.random.uniform(
        k_w, (n_classes, in_dim), dtype=dtype, minval=-bound, maxval=bound
    )
    bias = jax.random.uniform(
        k_b, (n_classes,), dtype=dtype, minval=-bound, maxval=bound
    )
    return weight, bias


if __name__ == "__main__":
    key = jax.random.PRNGKey(0)
    k_x, k_p, k_x2, k_p2 = jax.random.split(key, 4)

    # --- Small demo shapes consistent with the module (batch=8, in_dim=32, n_classes=16).
    batch, in_dim, n_classes = 8, 32, 16
    x = jax.random.normal(k_x, (batch, in_dim), dtype=jnp.float32)
    weight, bias = init_linear_params(k_p, in_dim, n_classes)
    params = prepare_linear_params(weight, bias)
    ref = jnp.dot(x, weight.T, precision=lax.Precision.HIGHEST) + bias

    # Default path (tiny shape -> XLA fast path).
    out_fast = jax.block_until_ready(linear_classifier(x, params))
    assert out_fast.shape == (batch, n_classes)
    assert jnp.allclose(out_fast, ref, atol=1e-4, rtol=1e-4), "fast-path mismatch"

    # Force the Pallas kernel on the small shape too (exercise padding + kernel).
    out_small = jax.block_until_ready(linear_classifier(x, params, force_pallas=True))
    assert out_small.shape == (batch, n_classes)
    assert jnp.allclose(out_small, ref, atol=1e-4, rtol=1e-4), "small-shape mismatch"

    # --- Larger shape exercising the real tiled grid: (2 N-tiles, 2 M-tiles, 2 K-steps)
    # plus padding / slicing on every axis.
    M2, K2, N2 = 600, 1300, 520
    x2 = jax.random.normal(k_x2, (M2, K2), dtype=jnp.float32)
    w2, b2 = init_linear_params(k_p2, K2, N2)
    params2 = prepare_linear_params(w2, b2)

    out2 = jax.block_until_ready(linear_classifier(x2, params2))
    ref2 = jnp.dot(x2, w2.T, precision=lax.Precision.HIGHEST) + b2
    assert out2.shape == (M2, N2)
    assert jnp.allclose(out2, ref2, atol=2e-3, rtol=2e-3), "tiled-shape mismatch"

    print("KERNEL_OK")
</pallas_src>

<mosaic_0001>
module attributes {stable_mosaic.version = 11 : i64} {
  func.func @_linear_bias_kernel(%arg0: i32, %arg1: i32, %arg2: i32, %arg3: memref<8x128xf32, #tpu.memory_space<vmem>>, %arg4: memref<128x256xf32, #tpu.memory_space<vmem>>, %arg5: memref<1x256xf32, #tpu.memory_space<vmem>>, %arg6: memref<8x256xf32, #tpu.memory_space<vmem>>) attributes {dimension_semantics = [#tpu.dimension_semantics<parallel>, #tpu.dimension_semantics<parallel>, #tpu.dimension_semantics<arbitrary>], iteration_bounds = array<i64: 1, 1, 1>, scalar_prefetch = 0 : i64, scratch_operands = 0 : i64, tpu.core_type = #tpu.core_type<tc>, window_params = [{transform_indices = @transform_0, window_bounds = array<i64: 8, 128>}, {transform_indices = @transform_1, window_bounds = array<i64: 128, 256>}, {transform_indices = @transform_2, window_bounds = array<i64: 1, 256>}, {transform_indices = @transform_3, window_bounds = array<i64: 8, 256>}]} {
    %c0_i32 = arith.constant 0 : i32
    %0 = arith.cmpi eq, %arg2, %c0_i32 : i32
    %1 = arith.extui %0 : i1 to i32
    %c0_i32_0 = arith.constant 0 : i32
    %2 = arith.cmpi ne, %1, %c0_i32_0 : i32
    scf.if %2 {
      %c0_8 = arith.constant 0 : index
      %c0_9 = arith.constant 0 : index
      %9 = vector.load %arg5[%c0_8, %c0_9] : memref<1x256xf32, #tpu.memory_space<vmem>>, vector<1x256xf32>
      %10 = vector.shape_cast %9 : vector<1x256xf32> to vector<1x256xf32>
      %11 = vector.broadcast %10 : vector<1x256xf32> to vector<8x256xf32>
      %c0_10 = arith.constant 0 : index
      %c0_11 = arith.constant 0 : index
      %12 = vector.load %arg6[%c0_10, %c0_11] : memref<8x256xf32, #tpu.memory_space<vmem>>, vector<8x256xf32>
      tpu.vector_store %arg6[%c0_10, %c0_11], %11 {strides = array<i32>} : memref<8x256xf32, #tpu.memory_space<vmem>>, vector<8x256xf32>,
    } else {
    }
    %c0 = arith.constant 0 : index
    %c0_1 = arith.constant 0 : index
    %3 = vector.load %arg6[%c0, %c0_1] : memref<8x256xf32, #tpu.memory_space<vmem>>, vector<8x256xf32>
    %c0_2 = arith.constant 0 : index
    %c0_3 = arith.constant 0 : index
    %4 = vector.load %arg3[%c0_2, %c0_3] : memref<8x128xf32, #tpu.memory_space<vmem>>, vector<8x128xf32>
    %c0_4 = arith.constant 0 : index
    %c0_5 = arith.constant 0 : index
    %5 = vector.load %arg4[%c0_4, %c0_5] : memref<128x256xf32, #tpu.memory_space<vmem>>, vector<128x256xf32>
    %cst = arith.constant dense<0.000000e+00> : vector<8x256xf32>
    %6 = tpu.matmul %4, %5, %cst {dimension_numbers = #tpu.dot_dimension_numbers<[1], [0], [0], [1], [0, 0, 1, 1], [], []>} : vector<8x128xf32>, vector<128x256xf32>, vector<8x256xf32> -> vector<8x256xf32>
    %7 = arith.addf %3, %6 : vector<8x256xf32>
    %c0_6 = arith.constant 0 : index
    %c0_7 = arith.constant 0 : index
    %8 = vector.load %arg6[%c0_6, %c0_7] : memref<8x256xf32, #tpu.memory_space<vmem>>, vector<8x256xf32>
    tpu.vector_store %arg6[%c0_6, %c0_7], %7 {strides = array<i32>} : memref<8x256xf32, #tpu.memory_space<vmem>>, vector<8x256xf32>,
    return
  }
  func.func @transform_0(%arg0: i32, %arg1: i32, %arg2: i32) -> (i32, i32) {
    %c0_i32 = arith.constant 0 : i32
    return %arg1, %arg2 : i32, i32
  }
  func.func @transform_1(%arg0: i32, %arg1: i32, %arg2: i32) -> (i32, i32) {
    %c0_i32 = arith.constant 0 : i32
    return %arg2, %arg0 : i32, i32
  }
  func.func @transform_2(%arg0: i32, %arg1: i32, %arg2: i32) -> (i32, i32) {
    %c0_i32 = arith.constant 0 : i32
    %c0_i32_0 = arith.constant 0 : i32
    return %c0_i32, %arg0 : i32, i32
  }
  func.func @transform_3(%arg0: i32, %arg1: i32, %arg2: i32) -> (i32, i32) {
    %c0_i32 = arith.constant 0 : i32
    return %arg1, %arg0 : i32, i32
  }
}

</mosaic_0001>

<llo_original>
// kernel: tpu_custom_call.1
$region0: #{tpu_custom_call.1}
  #allocation0 [shape = 'u32[]', space=smem, size = 0x4, offset = 0x4, fixed_abs, tag = 'smem constant byte address 0x4 - core index']
  #allocation1 [shape = 'u32[144,128]{1,0:T(1,128)}', space=vmem, size = 0x12000, scoped, tag = 'internal scratch']
  %s0 = inlined_call_operand.hbm [shape: f32[8,128], index: 0, kind: input, shape index: {}]
  %s1 = inlined_call_operand.hbm [shape: f32[128,256], index: 1, kind: input, shape index: {}]
  %s2 = inlined_call_operand.vmem [shape: f32[1,256], index: 2, kind: input, shape index: {}]
  %s3 = inlined_call_operand.hbm [shape: f32[8,256], index: 3, kind: output, shape index: {}]
  %s4 = sld [smem:[#allocation0]]
  $region34: #{tpu_custom_call.1} parent=0
    _
  %s6 = ssub.s32 1, %s4
  %s7 = scalar_select 0, %s6, %s4
  $region1: #{tpu_custom_call.1} parent=0
    #allocation2 [shape = 'u8[4096]{0}', space=vmem, size = 0x1000, scoped, tag = 'input window, operand 0, single buffered']
    #allocation3 [shape = 's32[1]{0}', space=sflag, size = 0x4, scoped, tag = 'scoped memory for tpu_custom_call.1']
    #allocation4 [shape = 's32[1]{0}', space=sflag, size = 0x4, scoped, tag = 'scoped memory for tpu_custom_call.1']
    #allocation5 [shape = 'u8[131072]{0}', space=vmem, size = 0x20000, scoped, tag = 'input window, operand 1, single buffered']
    #allocation6 [shape = 's32[1]{0}', space=sflag, size = 0x4, scoped, tag = 'scoped memory for tpu_custom_call.1']
    #allocation7 [shape = 'u8[8192]{0}', space=vmem, size = 0x2000, scoped, tag = 'output window, operand 0, single buffered']
    %8 = vsyncpa [#allocation3], 0
    %9 = vsyncpa [#allocation6], 0
    %10 = vsyncpa [#allocation4], 0
    // Predicated region
    $region2: #{tpu_custom_call.1} parent=1 // pred_check
      _
    $region3: #{tpu_custom_call.1} parent=1 // pred_check_branch
      %12 = sbr.rel (0) target = $region5
    $region4: #{tpu_custom_call.1} parent=1 // pred_region
      %s14 = ssub.s32 128, 128
      %15 = vsyncadd [#allocation3], %s14
      %s17 = sshll.u32 [#allocation2], 4
      %s18 = int_to_ptr.vmem [resolvable:$true] %s17
      %20 = dma.hbm_to_vmem [thread:$0]  %s0, 128, %s18, [#allocation3]
    $region5: #{tpu_custom_call.1} parent=1 // pred_fallthru
      _
    // Predicated region
    $region6: #{tpu_custom_call.1} parent=1 // pred_check
      _
    $region7: #{tpu_custom_call.1} parent=1 // pred_check_branch
      %22 = sbr.rel (0) target = $region9
    $region8: #{tpu_custom_call.1} parent=1 // pred_region
      %s24 = ssub.s32 4096, 4096
      %25 = vsyncadd [#allocation6], %s24
      %s26 = sshll.u32 [#allocation5], 4
      %s27 = int_to_ptr.vmem [resolvable:$true] %s26
      %32 = dma.hbm_to_vmem [thread:$0]  %s1, 4096, %s27, [#allocation6], 256, 256, 16
    $region9: #{tpu_custom_call.1} parent=1 // pred_fallthru
      _
    // Predicated region
    $region10: #{tpu_custom_call.1} parent=1 // pred_check
      _
    $region11: #{tpu_custom_call.1} parent=1 // pred_check_branch
      %34 = sbr.rel (0) target = $region13
    $region12: #{tpu_custom_call.1} parent=1 // pred_region
      _
    $region13: #{tpu_custom_call.1} parent=1 // pred_fallthru
      _
    // Predicated region
    $region14: #{tpu_custom_call.1} parent=1 // pred_check
      _
    $region15: #{tpu_custom_call.1} parent=1 // pred_check_branch
      %36 = sbr.rel (0) target = $region17
    $region16: #{tpu_custom_call.1} parent=1 // pred_region
      %37 = dma.done [#allocation3], 128
    $region17: #{tpu_custom_call.1} parent=1 // pred_fallthru
      _
    // Predicated region
    $region18: #{tpu_custom_call.1} parent=1 // pred_check
      _
    $region19: #{tpu_custom_call.1} parent=1 // pred_check_branch
      %39 = sbr.rel (0) target = $region21
    $region20: #{tpu_custom_call.1} parent=1 // pred_region
      %40 = dma.done [#allocation6], 4096
    $region21: #{tpu_custom_call.1} parent=1 // pred_fallthru
      _
    %p41 = scmp.eq.s32.totalorder 0, 0
    // Predicated region
    $region22: #{tpu_custom_call.1} parent=1 // pred_check
      %p42 = pneg %p41
    $region23: #{tpu_custom_call.1} parent=1 // pred_check_branch
      %44 = sbr.rel (%p42) target = $region25
    $region24: #{tpu_custom_call.1} parent=1 // pred_region
      %v45 = vld [vmem:[%s2] sm:$0x3]
      %v47 = vlaneseq
      %v48 = vshrl.u32 %v47, 7
      %v49 = vsub.s32 0, %v48
      %v50 = vrot.slane %v45, %v49
      %v51 = vlaneseq
      %v52 = vshrl.u32 %v51, 7
      %v53 = vsub.s32 1, %v52
      %v54 = vrot.slane %v45, %v53
      %57 = vst [vmem:[#allocation7] sm:$0xff] %v50
      %58 = vst [vmem:[#allocation7 + $0x8] sm:$0xff] %v54
    $region25: #{tpu_custom_call.1} parent=1 // pred_fallthru
      _
    %v59 = vld [vmem:[#allocation7] sm:$0xff]
    %v60 = vld [vmem:[#allocation7 + $0x8] sm:$0xff]
    %v61 = vld [vmem:[#allocation2] sm:$0xff]
    %v62 = vld [vmem:[#allocation5] sm:$0xff]
    %v63 = vld [vmem:[#allocation5 + $0x8] sm:$0xff]
    %v64 = vld [vmem:[#allocation5 + $0x10] sm:$0xff]
    %v65 = vld [vmem:[#allocation5 + $0x18] sm:$0xff]
    %v66 = vld [vmem:[#allocation5 + $0x20] sm:$0xff]
    %v67 = vld [vmem:[#allocation5 + $0x28] sm:$0xff]
    %v68 = vld [vmem:[#allocation5 + $0x30] sm:$0xff]
    %v69 = vld [vmem:[#allocation5 + $0x38] sm:$0xff]
    %v70 = vld [vmem:[#allocation5 + $0x40] sm:$0xff]
    %v71 = vld [vmem:[#allocation5 + $0x48] sm:$0xff]
    %v72 = vld [vmem:[#allocation5 + $0x50] sm:$0xff]
    %v73 = vld [vmem:[#allocation5 + $0x58] sm:$0xff]
    %v74 = vld [vmem:[#allocation5 + $0x60] sm:$0xff]
    %v75 = vld [vmem:[#allocation5 + $0x68] sm:$0xff]
    %v76 = vld [vmem:[#allocation5 + $0x70] sm:$0xff]
    %v77 = vld [vmem:[#allocation5 + $0x78] sm:$0xff]
    %v78 = vld [vmem:[#allocation5 + $0x80] sm:$0xff]
    %v79 = vld [vmem:[#allocation5 + $0x88] sm:$0xff]
    %v80 = vld [vmem:[#allocation5 + $0x90] sm:$0xff]
    %v81 = vld [vmem:[#allocation5 + $0x98] sm:$0xff]
    %v82 = vld [vmem:[#allocation5 + $0xa0] sm:$0xff]
    %v83 = vld [vmem:[#allocation5 + $0xa8] sm:$0xff]
    %v84 = vld [vmem:[#allocation5 + $0xb0] sm:$0xff]
    %v85 = vld [vmem:[#allocation5 + $0xb8] sm:$0xff]
    %v86 = vld [vmem:[#allocation5 + $0xc0] sm:$0xff]
    %v87 = vld [vmem:[#allocation5 + $0xc8] sm:$0xff]
    %v88 = vld [vmem:[#allocation5 + $0xd0] sm:$0xff]
    %v89 = vld [vmem:[#allocation5 + $0xd8] sm:$0xff]
    %v90 = vld [vmem:[#allocation5 + $0xe0] sm:$0xff]
    %v91 = vld [vmem:[#allocation5 + $0xe8] sm:$0xff]
    %v92 = vld [vmem:[#allocation5 + $0xf0] sm:$0xff]
    %v93 = vld [vmem:[#allocation5 + $0xf8] sm:$0xff]
    %94 = vmatprep.subr.mxu0 %v93
    %95 = vmatpush1.msra.mxu0 %v92
    %96 = vmatprep.subr.mxu0 %v91
    %97 = vmatpush1.msra.mxu0 %v90
    %98 = vmatprep.subr.mxu0 %v89
    %99 = vmatpush1.msra.mxu0 %v88
    %100 = vmatprep.subr.mxu0 %v87
    %101 = vmatpush1.msra.mxu0 %v86
    %102 = vmatprep.subr.mxu0 %v85
    %103 = vmatpush1.msra.mxu0 %v84
    %104 = vmatprep.subr.mxu0 %v83
    %105 = vmatpush1.msra.mxu0 %v82
    %106 = vmatprep.subr.mxu0 %v81
    %107 = vmatpush1.msra.mxu0 %v80
    %108 = vmatprep.subr.mxu0 %v79
    %109 = vmatpush1.msra.mxu0 %v78
    %110 = vmatprep.subr.mxu0 %v77
    %111 = vmatpush1.msra.mxu0 %v76
    %112 = vmatprep.subr.mxu0 %v75
    %113 = vmatpush1.msra.mxu0 %v74
    %114 = vmatprep.subr.mxu0 %v73
    %115 = vmatpush1.msra.mxu0 %v72
    %116 = vmatprep.subr.mxu0 %v71
    %117 = vmatpush1.msra.mxu0 %v70
    %118 = vmatprep.subr.mxu0 %v69
    %119 = vmatpush1.msra.mxu0 %v68
    %120 = vmatprep.subr.mxu0 %v67
    %121 = vmatpush1.msra.mxu0 %v66
    %122 = vmatprep.subr.mxu0 %v65
    %123 = vmatpush1.msra.mxu0 %v64
    %124 = vmatprep.subr.mxu0 %v63
    %125 = vmatpush1.msra.mxu0 %v62
    %126 = vmatprep.subr.mxu0 0.0
    %127 = vmatpush2.msra.mxu0 0.0
    %128 = vmatprep.subr.mxu0 0.0
    %129 = vmatpush2.msra.mxu0 0.0
    %130 = vmatprep.subr.mxu0 0.0
    %131 = vmatpush2.msra.mxu0 0.0
    %132 = vmatprep.subr.mxu0 0.0
    %133 = vmatpush2.msra.mxu0 0.0
    %134 = vmatprep.subr.mxu0 0.0
    %135 = vmatpush2.msra.mxu0 0.0
    %136 = vmatprep.subr.mxu0 0.0
    %137 = vmatpush2.msra.mxu0 0.0
    %138 = vmatprep.subr.mxu0 0.0
    %139 = vmatpush2.msra.mxu0 0.0
    %140 = vmatprep.subr.mxu0 0.0
    %141 = vmatpush2.msra.mxu0 0.0
    %142 = vmatprep.subr.mxu0 0.0
    %143 = vmatpush2.msra.mxu0 0.0
    %144 = vmatprep.subr.mxu0 0.0
    %145 = vmatpush2.msra.mxu0 0.0
    %146 = vmatprep.subr.mxu0 0.0
    %147 = vmatpush2.msra.mxu0 0.0
    %148 = vmatprep.subr.mxu0 0.0
    %149 = vmatpush2.msra.mxu0 0.0
    %150 = vmatprep.subr.mxu0 0.0
    %151 = vmatpush2.msra.mxu0 0.0
    %152 = vmatprep.subr.mxu0 0.0
    %153 = vmatpush2.msra.mxu0 0.0
    %154 = vmatprep.subr.mxu0 0.0
    %155 = vmatpush2.msra.mxu0 0.0
    %156 = vmatprep.subr.mxu0 0.0
    %157 = vmatpush2.msra.mxu0 0.0
    %158 = vmatprep.mubr.f32.mxu0 0.0
    %159 = vmatmul.mubr.f32.gmra.mxu0 %v61
    %v160 = vpop.f32.mrf.mxu0
    %v161 = vadd.f32 0.0, %v160
    %v162 = vpop.f32.mrf.mxu0
    %v163 = vadd.f32 0.0, %v162
    %164 = vdwg.mxu0
    %v165 = vadd.f32 %v59, %v161
    %v166 = vadd.f32 %v60, %v163
    %167 = vst [vmem:[#allocation7] sm:$0xff] %v165
    %168 = vst [vmem:[#allocation7 + $0x8] sm:$0xff] %v166
    // Predicated region
    $region26: #{tpu_custom_call.1} parent=1 // pred_check
      _
    $region27: #{tpu_custom_call.1} parent=1 // pred_check_branch
      %170 = sbr.rel (0) target = $region29
    $region28: #{tpu_custom_call.1} parent=1 // pred_region
      %s172 = ssub.s32 256, 256
      %173 = vsyncadd [#allocation4], %s172
      %s175 = sshll.u32 [#allocation7], 4
      %s176 = int_to_ptr.vmem [resolvable:$true] %s175
      %178 = dma.vmem_to_hbm [thread:$0]  %s176, 256, %s3, [#allocation4]
    $region29: #{tpu_custom_call.1} parent=1 // pred_fallthru
      _
    // Predicated region
    $region30: #{tpu_custom_call.1} parent=1 // pred_check
      _
    $region31: #{tpu_custom_call.1} parent=1 // pred_check_branch
      %180 = sbr.rel (0) target = $region33
    $region32: #{tpu_custom_call.1} parent=1 // pred_region
      %181 = dma.done [#allocation4], 256
    $region33: #{tpu_custom_call.1} parent=1 // pred_fallthru
      _
    %182 = vsyncpa [#allocation3], 1
    %183 = vsyncpa [#allocation6], 1
    %184 = vsyncpa [#allocation4], 1

</llo_original>
